<compile_context>
chip_gen: v6e
topology: v6e:2x2x1
jax: 0.10.0
libtpu: 0.0.40
codegen_flags: <defaults>
</compile_context>

<pallas_src>
from functools import partial

import jax
import jax.numpy as jnp
from jax.experimental import pallas as pl
from jax.experimental.pallas import tpu as pltpu

KERNEL_SIZE = 5
PADDING = 1


def cnn_kernel(x_ref, w_ref, b_ref, o_ref, *, l_out, tb):
    # x_ref: (TB, C_in, L)        unpadded input block
    # w_ref: (C_out, K*C_in)      im2col weights, row index = k*C_in + i
    # b_ref: (C_out, 1)
    # o_ref: (1, C_out, TB)       lane-dense output slab (batch on lanes)
    c_in = x_ref.shape[1]
    w = w_ref[...]                                    # weight tile loaded once
    zpad = jnp.zeros((c_in, PADDING), jnp.float32)

    # Batched im2col operand built once per grid step: (K*C_in, TB*L_out).
    # Only slicing / concatenation here (VMEM + XLU); the MXU sees ONE push.
    blocks = []
    for bi in range(tb):                              # tb is small & static
        # in-kernel zero padding (VMEM only, no HBM copy of x)
        xp = jnp.concatenate([zpad, x_ref[bi], zpad], axis=-1)   # (C_in, L+2P)
        # row k*C_in + i holds xp[i, t+k]
        blocks.append(jnp.concatenate(
            [xp[:, k:k + l_out] for k in range(KERNEL_SIZE)], axis=0))
    cols = blocks[0] if tb == 1 else jnp.concatenate(blocks, axis=-1)

    # single MXU contraction per grid step, f32 accumulation
    y = jnp.dot(w, cols, preferred_element_type=jnp.float32)    # (C_out, TB*L_out)

    # AdaptiveMaxPool1d(1): per-example max over L_out.
    if tb == 1:
        m = jnp.max(y, axis=-1, keepdims=True)                  # (C_out, 1)
    else:
        m = jnp.concatenate(
            [jnp.max(y[:, bi * l_out:(bi + 1) * l_out], axis=-1, keepdims=True)
             for bi in range(tb)], axis=-1)                     # (C_out, TB)

    # bias + ReLU commute with the length-axis max (both monotone);
    # single slab store of the whole (C_out, TB) result.
    o_ref[0] = jnp.maximum(m + b_ref[...], 0.0)


def _pick_tb(n, c_in, length, c_out, l_out):
    """Choose the batch tile: one grid step for small N, VMEM/lane-capped
    (divisor of N) for larger N so the same heuristic scales on v7x's smaller
    VMEM as well as v5e/v6e."""
    per_ex_bytes = 4 * (
        2 * c_in * length                    # x block, double-buffered
        + c_in * (length + 2 * PADDING)      # padded copy
        + KERNEL_SIZE * c_in * l_out         # im2col operand
        + c_out * l_out                      # matmul result
        + 2 * c_out)                         # output block, double-buffered
    vmem_budget = 8 * 1024 * 1024            # well under the 32 MiB scoped default
    tb_cap = max(1, vmem_budget // max(per_ex_bytes, 1))
    # keep the static unroll and the result lane width sane (~1024 lanes/step)
    tb_cap = min(tb_cap, max(1, 1024 // max(l_out, 1)), 64)
    if n <= tb_cap:
        return n                             # single grid step for tiny N
    tb = tb_cap
    while n % tb != 0:                       # largest divisor of n within cap
        tb -= 1
    return tb


def cnn_forward(x, w, b):
    """x: (N, C_in, L) f32, w: (C_out, C_in, K) f32, b: (C_out,) f32
    returns: (N, C_out) f32"""
    n, c_in, length = x.shape
    c_out, _, k = w.shape
    assert k == KERNEL_SIZE
    l_out = length + 2 * PADDING - KERNEL_SIZE + 1
    assert l_out >= 1

    tb = _pick_tb(n, c_in, length, c_out, l_out)
    gn = n // tb

    # im2col weight layout: w2[o, k*C_in + i] = w[o, i, k]
    w2 = jnp.transpose(w, (0, 2, 1)).reshape(c_out, KERNEL_SIZE * c_in)
    b2 = b.reshape(c_out, 1)

    out = pl.pallas_call(
        partial(cnn_kernel, l_out=l_out, tb=tb),
        out_shape=jax.ShapeDtypeStruct((gn, c_out, tb), jnp.float32),
        grid=(gn,),
        in_specs=[
            pl.BlockSpec((tb, c_in, length), lambda i: (i, 0, 0)),
            pl.BlockSpec((c_out, KERNEL_SIZE * c_in), lambda i: (0, 0)),
            pl.BlockSpec((c_out, 1), lambda i: (0, 0)),
        ],
        out_specs=pl.BlockSpec((1, c_out, tb), lambda i: (i, 0, 0)),
        compiler_params=pltpu.CompilerParams(
            dimension_semantics=("parallel",)),
    )(x, w2, b2)

    # wrapper-side layout plumbing: (gn, C_out, TB) -> (N, C_out)
    return jnp.transpose(out, (0, 2, 1)).reshape(n, c_out)


def ref_forward(x, w, b):
    # pure-JAX reference (matches PyTorch Conv1d -> ReLU -> AdaptiveMaxPool1d(1))
    y = jax.lax.conv_general_dilated(
        x, w, window_strides=(1,), padding=[(PADDING, PADDING)],
        dimension_numbers=("NCH", "OIH", "NCH"))
    y = y + b[None, :, None]
    y = jnp.maximum(y, 0.0)
    return jnp.max(y, axis=-1)


if __name__ == "__main__":
    batch, in_channels, out_channels, length = 2, 4, 8, 16

    key = jax.random.PRNGKey(0)
    kx, kw, kb = jax.random.split(key, 3)
    x = jax.random.normal(kx, (batch, in_channels, length), dtype=jnp.float32)
    # deterministic parameter init (PyTorch-style uniform bound)
    fan_in = in_channels * KERNEL_SIZE
    bound = 1.0 / (fan_in ** 0.5)
    w = jax.random.uniform(kw, (out_channels, in_channels, KERNEL_SIZE),
                           minval=-bound, maxval=bound, dtype=jnp.float32)
    b = jax.random.uniform(kb, (out_channels,),
                           minval=-bound, maxval=bound, dtype=jnp.float32)

    y = cnn_forward(x, w, b)
    jax.block_until_ready(y)

    y_ref = ref_forward(x, w, b)
    assert y.shape == (batch, out_channels)
    assert jnp.allclose(y, y_ref, atol=1e-5, rtol=1e-5), "mismatch vs reference"

    print("KERNEL_OK")
</pallas_src>

<mosaic_0001>
module attributes {stable_mosaic.version = 11 : i64} {
  func.func @cnn_kernel(%arg0: i32, %arg1: memref<2x4x16xf32, #tpu.memory_space<vmem>>, %arg2: memref<8x20xf32, #tpu.memory_space<vmem>>, %arg3: memref<8x1xf32, #tpu.memory_space<vmem>>, %arg4: memref<1x8x2xf32, #tpu.memory_space<vmem>>) attributes {dimension_semantics = [#tpu.dimension_semantics<parallel>], iteration_bounds = array<i64: 1>, scalar_prefetch = 0 : i64, scratch_operands = 0 : i64, tpu.core_type = #tpu.core_type<tc>, window_params = [{transform_indices = @transform_0, window_bounds = array<i64: 2, 4, 16>}, {pipeline_mode = #tpu.pipeline_mode<synchronous>, transform_indices = @transform_1, window_bounds = array<i64: 8, 20>}, {pipeline_mode = #tpu.pipeline_mode<synchronous>, transform_indices = @transform_2, window_bounds = array<i64: 8, 1>}, {transform_indices = @transform_3, window_bounds = array<i64: 1, 8, 2>}]} {
    %c0 = arith.constant 0 : index
    %c0_0 = arith.constant 0 : index
    %0 = vector.load %arg2[%c0, %c0_0] : memref<8x20xf32, #tpu.memory_space<vmem>>, vector<8x20xf32>
    %cst = arith.constant 0.000000e+00 : f32
    %1 = vector.broadcast %cst : f32 to vector<4x1xf32>
    %c0_1 = arith.constant 0 : index
    %c0_2 = arith.constant 0 : index
    %c0_3 = arith.constant 0 : index
    %2 = vector.load %arg1[%c0_1, %c0_2, %c0_3] : memref<2x4x16xf32, #tpu.memory_space<vmem>>, vector<1x4x16xf32>
    %3 = vector.shape_cast %2 : vector<1x4x16xf32> to vector<4x16xf32>
    %4 = tpu.concatenate %1, %3, %1 in 1 : vector<4x1xf32>, vector<4x16xf32>, vector<4x1xf32> -> vector<4x18xf32>
    %5 = vector.extract_strided_slice %4 {offsets = [0, 0], sizes = [4, 14], strides = [1, 1]} : vector<4x18xf32> to vector<4x14xf32>
    %6 = vector.extract_strided_slice %4 {offsets = [0, 1], sizes = [4, 14], strides = [1, 1]} : vector<4x18xf32> to vector<4x14xf32>
    %7 = vector.extract_strided_slice %4 {offsets = [0, 2], sizes = [4, 14], strides = [1, 1]} : vector<4x18xf32> to vector<4x14xf32>
    %8 = vector.extract_strided_slice %4 {offsets = [0, 3], sizes = [4, 14], strides = [1, 1]} : vector<4x18xf32> to vector<4x14xf32>
    %9 = vector.extract_strided_slice %4 {offsets = [0, 4], sizes = [4, 14], strides = [1, 1]} : vector<4x18xf32> to vector<4x14xf32>
    %10 = tpu.concatenate %5, %6, %7, %8, %9 in 0 : vector<4x14xf32>, vector<4x14xf32>, vector<4x14xf32>, vector<4x14xf32>, vector<4x14xf32> -> vector<20x14xf32>
    %c1 = arith.constant 1 : index
    %c0_4 = arith.constant 0 : index
    %c0_5 = arith.constant 0 : index
    %11 = vector.load %arg1[%c1, %c0_4, %c0_5] : memref<2x4x16xf32, #tpu.memory_space<vmem>>, vector<1x4x16xf32>
    %12 = vector.shape_cast %11 : vector<1x4x16xf32> to vector<4x16xf32>
    %13 = tpu.concatenate %1, %12, %1 in 1 : vector<4x1xf32>, vector<4x16xf32>, vector<4x1xf32> -> vector<4x18xf32>
    %14 = vector.extract_strided_slice %13 {offsets = [0, 0], sizes = [4, 14], strides = [1, 1]} : vector<4x18xf32> to vector<4x14xf32>
    %15 = vector.extract_strided_slice %13 {offsets = [0, 1], sizes = [4, 14], strides = [1, 1]} : vector<4x18xf32> to vector<4x14xf32>
    %16 = vector.extract_strided_slice %13 {offsets = [0, 2], sizes = [4, 14], strides = [1, 1]} : vector<4x18xf32> to vector<4x14xf32>
    %17 = vector.extract_strided_slice %13 {offsets = [0, 3], sizes = [4, 14], strides = [1, 1]} : vector<4x18xf32> to vector<4x14xf32>
    %18 = vector.extract_strided_slice %13 {offsets = [0, 4], sizes = [4, 14], strides = [1, 1]} : vector<4x18xf32> to vector<4x14xf32>
    %19 = tpu.concatenate %14, %15, %16, %17, %18 in 0 : vector<4x14xf32>, vector<4x14xf32>, vector<4x14xf32>, vector<4x14xf32>, vector<4x14xf32> -> vector<20x14xf32>
    %20 = tpu.concatenate %10, %19 in 1 : vector<20x14xf32>, vector<20x14xf32> -> vector<20x28xf32>
    %cst_6 = arith.constant dense<0.000000e+00> : vector<8x28xf32>
    %21 = tpu.matmul %0, %20, %cst_6 {dimension_numbers = #tpu.dot_dimension_numbers<[1], [0], [0], [1], [0, 0, 1, 1], [], []>} : vector<8x20xf32>, vector<20x28xf32>, vector<8x28xf32> -> vector<8x28xf32>
    %22 = vector.extract_strided_slice %21 {offsets = [0, 0], sizes = [8, 14], strides = [1, 1]} : vector<8x28xf32> to vector<8x14xf32>
    %cst_7 = arith.constant dense<0xFF800000> : vector<8xf32>
    %23 = vector.multi_reduction <maximumf>, %22, %cst_7 [1] : vector<8x14xf32> to vector<8xf32>
    %24 = vector.shape_cast %23 : vector<8xf32> to vector<8x1xf32>
    %25 = vector.extract_strided_slice %21 {offsets = [0, 14], sizes = [8, 14], strides = [1, 1]} : vector<8x28xf32> to vector<8x14xf32>
    %cst_8 = arith.constant dense<0xFF800000> : vector<8xf32>
    %26 = vector.multi_reduction <maximumf>, %25, %cst_8 [1] : vector<8x14xf32> to vector<8xf32>
    %27 = vector.shape_cast %26 : vector<8xf32> to vector<8x1xf32>
    %28 = tpu.concatenate %24, %27 in 1 : vector<8x1xf32>, vector<8x1xf32> -> vector<8x2xf32>
    %c0_9 = arith.constant 0 : index
    %c0_10 = arith.constant 0 : index
    %29 = vector.load %arg3[%c0_9, %c0_10] : memref<8x1xf32, #tpu.memory_space<vmem>>, vector<8x1xf32>
    %30 = vector.broadcast %29 : vector<8x1xf32> to vector<8x2xf32>
    %31 = arith.addf %28, %30 : vector<8x2xf32>
    %cst_11 = arith.constant 0.000000e+00 : f32
    %32 = vector.broadcast %cst_11 : f32 to vector<8x2xf32>
    %33 = arith.maximumf %31, %32 : vector<8x2xf32>
    %c0_12 = arith.constant 0 : index
    %c0_13 = arith.constant 0 : index
    %c0_14 = arith.constant 0 : index
    %34 = vector.load %arg4[%c0_12, %c0_13, %c0_14] : memref<1x8x2xf32, #tpu.memory_space<vmem>>, vector<1x8x2xf32>
    %35 = vector.shape_cast %34 : vector<1x8x2xf32> to vector<8x2xf32>
    %36 = vector.shape_cast %33 : vector<8x2xf32> to vector<1x8x2xf32>
    tpu.vector_store %arg4[%c0_12, %c0_13, %c0_14], %36 {strides = array<i32>} : memref<1x8x2xf32, #tpu.memory_space<vmem>>, vector<1x8x2xf32>,
    return
  }
  func.func @transform_0(%arg0: i32) -> (i32, i32, i32) {
    %c0_i32 = arith.constant 0 : i32
    %c0_i32_0 = arith.constant 0 : i32
    %c0_i32_1 = arith.constant 0 : i32
    return %arg0, %c0_i32, %c0_i32_0 : i32, i32, i32
  }
  func.func @transform_1(%arg0: i32) -> (i32, i32) {
    %c0_i32 = arith.constant 0 : i32
    %c0_i32_0 = arith.constant 0 : i32
    %c0_i32_1 = arith.constant 0 : i32
    return %c0_i32, %c0_i32_0 : i32, i32
  }
  func.func @transform_2(%arg0: i32) -> (i32, i32) {
    %c0_i32 = arith.constant 0 : i32
    %c0_i32_0 = arith.constant 0 : i32
    %c0_i32_1 = arith.constant 0 : i32
    return %c0_i32, %c0_i32_0 : i32, i32
  }
  func.func @transform_3(%arg0: i32) -> (i32, i32, i32) {
    %c0_i32 = arith.constant 0 : i32
    %c0_i32_0 = arith.constant 0 : i32
    %c0_i32_1 = arith.constant 0 : i32
    return %arg0, %c0_i32, %c0_i32_0 : i32, i32, i32
  }
}

</mosaic_0001>

<llo_original>
// kernel: tpu_custom_call.1
$region0: #{tpu_custom_call.1}
  #allocation0 [shape = 'u32[]', space=smem, size = 0x4, offset = 0x4, fixed_abs, tag = 'smem constant byte address 0x4 - core index']
  #allocation1 [shape = 'u32[144,128]{1,0:T(1,128)}', space=vmem, size = 0x12000, scoped, tag = 'internal scratch']
  %s0 = inlined_call_operand.vmem [shape: f32[2,4,16], index: 0, kind: input, shape index: {}]
  %s1 = inlined_call_operand.hbm [shape: f32[8,20], index: 1, kind: input, shape index: {}]
  %s2 = inlined_call_operand.vmem [shape: f32[8,1], index: 2, kind: input, shape index: {}]
  %s3 = inlined_call_operand.vmem [shape: f32[1,8,2], index: 3, kind: output, shape index: {}]
  %s4 = sld [smem:[#allocation0]]
  $region26: #{tpu_custom_call.1} parent=0
    _
  %s6 = ssub.s32 1, %s4
  %s7 = scalar_select 0, %s6, %s4
  $region1: #{tpu_custom_call.1} parent=0
    #allocation2 [shape = 'u8[4096]{0}', space=vmem, size = 0x1000, scoped, tag = 'input window, operand 1, single buffered']
    #allocation3 [shape = 's32[1]{0}', space=sflag, size = 0x4, scoped, tag = 'scoped memory for tpu_custom_call.1']
    %8 = vsyncpa [#allocation3], 0
    // Predicated region
    $region2: #{tpu_custom_call.1} parent=1 // pred_check
      _
    $region3: #{tpu_custom_call.1} parent=1 // pred_check_branch
      %10 = sbr.rel (0) target = $region5
    $region4: #{tpu_custom_call.1} parent=1 // pred_region
      _
    $region5: #{tpu_custom_call.1} parent=1 // pred_fallthru
      _
    // Predicated region
    $region6: #{tpu_custom_call.1} parent=1 // pred_check
      _
    $region7: #{tpu_custom_call.1} parent=1 // pred_check_branch
      %12 = sbr.rel (0) target = $region9
    $region8: #{tpu_custom_call.1} parent=1 // pred_region
      %s14 = ssub.s32 128, 128
      %15 = vsyncadd [#allocation3], %s14
      %s17 = sshll.u32 [#allocation2], 4
      %s18 = int_to_ptr.vmem [resolvable:$true] %s17
      %20 = dma.hbm_to_vmem [thread:$0]  %s1, 128, %s18, [#allocation3]
    $region9: #{tpu_custom_call.1} parent=1 // pred_fallthru
      _
    // Predicated region
    $region10: #{tpu_custom_call.1} parent=1 // pred_check
      _
    $region11: #{tpu_custom_call.1} parent=1 // pred_check_branch
      %22 = sbr.rel (0) target = $region13
    $region12: #{tpu_custom_call.1} parent=1 // pred_region
      _
    $region13: #{tpu_custom_call.1} parent=1 // pred_fallthru
      _
    // Predicated region
    $region14: #{tpu_custom_call.1} parent=1 // pred_check
      _
    $region15: #{tpu_custom_call.1} parent=1 // pred_check_branch
      %24 = sbr.rel (0) target = $region17
    $region16: #{tpu_custom_call.1} parent=1 // pred_region
      %25 = dma.done [#allocation3], 128
    $region17: #{tpu_custom_call.1} parent=1 // pred_fallthru
      _
    %v26 = vld [vmem:[#allocation2] sm:$0xff]
    %v27 = vld [vmem:[%s0] sm:$0xf]
    %29 = vrot.lane.b32.xlu0 %v27, 1
    %v30 = vpop.permute.xlu0 %29
    %vm32 = vcmask 7168
    %v33 = vsel %vm32, 0.0, %v30
    %vm34 = vcmask 138240
    %v35 = vsel %vm34, %v33, 0.0
    %v37 = vrot.slane %v35, 4
    %38 = vrot.lane.b32.xlu0 %v37, 127
    %v39 = vpop.permute.xlu0 %38
    %41 = vrot.lane.b32.xlu0 %v35, 126
    %v42 = vpop.permute.xlu0 %41
    %44 = vrot.lane.b32.xlu0 %v37, 125
    %v45 = vpop.permute.xlu0 %44
    %47 = vrot.lane.b32.xlu0 %v35, 124
    %v48 = vpop.permute.xlu0 %47
    %vm50 = vcmask 1043456
    %v51 = vsel %vm50, %v35, %v39
    %v52 = vsel %vm50, %v42, %v45
    %s53 = scalar_lea.vmem %s0, 4
    %v54 = vld [vmem:[%s53] sm:$0xf]
    %56 = vrot.lane.b32.xlu0 %v54, 1
    %v57 = vpop.permute.xlu0 %56
    %v59 = vsel %vm32, 0.0, %v57
    %v60 = vsel %vm34, %v59, 0.0
    %v62 = vrot.slane %v60, 4
    %63 = vrot.lane.b32.xlu0 %v62, 127
    %v64 = vpop.permute.xlu0 %63
    %66 = vrot.lane.b32.xlu0 %v60, 126
    %v67 = vpop.permute.xlu0 %66
    %69 = vrot.lane.b32.xlu0 %v62, 125
    %v70 = vpop.permute.xlu0 %69
    %72 = vrot.lane.b32.xlu0 %v60, 124
    %v73 = vpop.permute.xlu0 %72
    %v74 = vsel %vm50, %v60, %v64
    %v75 = vsel %vm50, %v67, %v70
    %78 = vrot.lane.b32.xlu0 %v74, 14
    %v79 = vpop.permute.xlu0 %78
    %80 = vrot.lane.b32.xlu0 %v75, 14
    %v81 = vpop.permute.xlu0 %80
    %82 = vrot.lane.b32.xlu0 %v73, 14
    %v83 = vpop.permute.xlu0 %82
    %vm87 = vcmask 113664
    %v88 = vsel %vm87, %v51, %v79
    %v89 = vsel %vm87, %v52, %v81
    %v90 = vsel %vm87, %v48, %v83
    %vm91 = vcmask 162816
    %v93 = vsel %vm91, %v26, 0
    %v96 = vsel %vm50, %v90, 0
    %98 = vmatprep.subr.mxu0 0.0
    %99 = vmatpush1.msra.mxu0 0.0
    %100 = vmatprep.subr.mxu0 0.0
    %101 = vmatpush1.msra.mxu0 0.0
    %102 = vmatprep.subr.mxu0 0.0
    %103 = vmatpush1.msra.mxu0 0.0
    %104 = vmatprep.subr.mxu0 0.0
    %105 = vmatpush1.msra.mxu0 0.0
    %106 = vmatprep.subr.mxu0 0.0
    %107 = vmatpush1.msra.mxu0 0.0
    %108 = vmatprep.subr.mxu0 0.0
    %109 = vmatpush1.msra.mxu0 0.0
    %110 = vmatprep.subr.mxu0 0.0
    %111 = vmatpush1.msra.mxu0 0.0
    %112 = vmatprep.subr.mxu0 0.0
    %113 = vmatpush1.msra.mxu0 0.0
    %114 = vmatprep.subr.mxu0 0.0
    %115 = vmatpush1.msra.mxu0 0.0
    %116 = vmatprep.subr.mxu0 0.0
    %117 = vmatpush1.msra.mxu0 0.0
    %118 = vmatprep.subr.mxu0 0.0
    %119 = vmatpush1.msra.mxu0 0.0
    %120 = vmatprep.subr.mxu0 0.0
    %121 = vmatpush1.msra.mxu0 0.0
    %122 = vmatprep.subr.mxu0 0.0
    %123 = vmatpush1.msra.mxu0 0.0
    %124 = vmatprep.subr.mxu0 0.0
    %125 = vmatpush1.msra.mxu0 %v96
    %126 = vmatprep.subr.mxu0 0.0
    %127 = vmatpush1.msra.mxu0 %v89
    %128 = vmatprep.subr.mxu0 0.0
    %129 = vmatpush1.msra.mxu0 %v88
    %130 = vmatprep.subr.mxu0 0.0
    %131 = vmatpush2.msra.mxu0 0.0
    %132 = vmatprep.subr.mxu0 0.0
    %133 = vmatpush2.msra.mxu0 0.0
    %134 = vmatprep.subr.mxu0 0.0
    %135 = vmatpush2.msra.mxu0 0.0
    %136 = vmatprep.subr.mxu0 0.0
    %137 = vmatpush2.msra.mxu0 0.0
    %138 = vmatprep.subr.mxu0 0.0
    %139 = vmatpush2.msra.mxu0 0.0
    %140 = vmatprep.subr.mxu0 0.0
    %141 = vmatpush2.msra.mxu0 0.0
    %142 = vmatprep.subr.mxu0 0.0
    %143 = vmatpush2.msra.mxu0 0.0
    %144 = vmatprep.subr.mxu0 0.0
    %145 = vmatpush2.msra.mxu0 0.0
    %146 = vmatprep.subr.mxu0 0.0
    %147 = vmatpush2.msra.mxu0 0.0
    %148 = vmatprep.subr.mxu0 0.0
    %149 = vmatpush2.msra.mxu0 0.0
    %150 = vmatprep.subr.mxu0 0.0
    %151 = vmatpush2.msra.mxu0 0.0
    %152 = vmatprep.subr.mxu0 0.0
    %153 = vmatpush2.msra.mxu0 0.0
    %154 = vmatprep.subr.mxu0 0.0
    %155 = vmatpush2.msra.mxu0 0.0
    %156 = vmatprep.subr.mxu0 0.0
    %157 = vmatpush2.msra.mxu0 0.0
    %158 = vmatprep.subr.mxu0 0.0
    %159 = vmatpush2.msra.mxu0 0.0
    %160 = vmatprep.subr.mxu0 0.0
    %161 = vmatpush2.msra.mxu0 0.0
    %162 = vmatprep.mubr.f32.mxu0 0.0
    %163 = vmatmul.mubr.f32.gmra.mxu0 %v93
    %v164 = vpop.f32.mrf.mxu0
    %v165 = vadd.f32 0.0, %v164
    %v166 = vpop.f32.mrf.mxu0
    %167 = vdwg.mxu0
    %v168 = vsel %vm87, %v165, -inf
    %169 = vmax.xlane.f32.xlu0 %v168
    %v170 = vpop.xlane.xlu0 %169
    %vm171 = vcmask 228464
    %v172 = vsel %vm171, %v165, -inf
    %173 = vmax.xlane.f32.xlu0 %v172
    %v174 = vpop.xlane.xlu0 %173
    %v175 = vsel %vm32, %v170, %v174
    %v176 = vld [vmem:[%s2] sm:$0xff]
    %178 = vset.pattern.permute.xlu0 0
    %179 = vperm.xlu0 %178, %v176
    %v180 = vpop.permute.xlu0 %179
    %v182 = vadd.f32 %v175, %v180
    %v183 = vmax.f32 %v182, 0.0
    %vm184 = vcmask 15360
    %185 = vst.msk [vmem:[%s3] sm:$0xff] %vm184, %v183
    // Predicated region
    $region18: #{tpu_custom_call.1} parent=1 // pred_check
      _
    $region19: #{tpu_custom_call.1} parent=1 // pred_check_branch
      %187 = sbr.rel (0) target = $region21
    $region20: #{tpu_custom_call.1} parent=1 // pred_region
      _
    $region21: #{tpu_custom_call.1} parent=1 // pred_fallthru
      _
    // Predicated region
    $region22: #{tpu_custom_call.1} parent=1 // pred_check
      _
    $region23: #{tpu_custom_call.1} parent=1 // pred_check_branch
      %189 = sbr.rel (0) target = $region25
    $region24: #{tpu_custom_call.1} parent=1 // pred_region
      _
    $region25: #{tpu_custom_call.1} parent=1 // pred_fallthru
      _
    %190 = vsyncpa [#allocation3], 1

</llo_original>
